<compile_context>
chip_gen: v7x
topology: tpu7x:2x2x1
jax: 0.10.0
libtpu: 0.0.40
codegen_flags: <defaults>
</compile_context>

<pallas_src>
import functools

import jax
import jax.numpy as jnp
from jax import lax
from jax.experimental import pallas as pl
from jax.experimental.pallas import tpu as pltpu

INPUT_DIM = 3
HIDDEN_DIM = 50
HIDDEN_LAYERS = 3
OUTPUT_DIM = 1

# Width (in batch points / lanes) of the sub-blocks processed per inner-loop
# iteration.  Multiple of 256 -> aligned to the v6e/v7x MXU (2x128 on v5e).
LANE_TILE = 256


def _round_up(a, b):
    return (a + b - 1) // b * b


def _choose_tile(n, tile_n):
    """Grid tile: big enough to amortize step overhead, small enough that
    mid-size batches still yield >= 2 grid steps (v7x dual-TensorCore)."""
    half = _round_up(max(1, (n + 1) // 2), LANE_TILE)
    return max(LANE_TILE, min(tile_n, half))


def _pinn_kernel(x_ref,
                 w1_ref, b1_ref,
                 w2_ref, b2_ref,
                 w3_ref, b3_ref,
                 w4_ref, b4_ref,
                 o_ref):
    """Fused MLP on one (3, tile) batch tile, transposed (batch-on-lanes) layout."""
    tile = x_ref.shape[1]
    num_sub = tile // LANE_TILE

    # Hoisted once per grid step: parameter reads and bias lane-broadcasts are
    # loop-invariant (re-reading them per sub-block would re-issue ~50 vlds and
    # a fresh broadcast_in_dim each iteration — JAX does not CSE those).
    w1 = w1_ref[...]                                              # (50, 3)
    w2 = w2_ref[...]                                              # (50, 50)
    w3 = w3_ref[...]                                              # (50, 50)
    w4 = w4_ref[...]                                              # (1, 50)
    b1 = jnp.broadcast_to(b1_ref[...], (HIDDEN_DIM, LANE_TILE))
    b2 = jnp.broadcast_to(b2_ref[...], (HIDDEN_DIM, LANE_TILE))
    b3 = jnp.broadcast_to(b3_ref[...], (HIDDEN_DIM, LANE_TILE))
    b4 = jnp.broadcast_to(b4_ref[...], (OUTPUT_DIM, LANE_TILE))

    def body(s, carry):
        lo = pl.multiple_of(s * LANE_TILE, LANE_TILE)
        xs = x_ref[:, pl.ds(lo, LANE_TILE)]                       # (3, 256)

        h = jnp.dot(w1, xs, preferred_element_type=jnp.float32) + b1
        h = jnp.maximum(h, 0.0)
        h = jnp.dot(w2, h, preferred_element_type=jnp.float32) + b2
        h = jnp.maximum(h, 0.0)
        h = jnp.dot(w3, h, preferred_element_type=jnp.float32) + b3
        h = jnp.maximum(h, 0.0)

        # 50 -> 1 head on the (otherwise idle) MXU; result is born lane-dense.
        y = jnp.dot(w4, h, preferred_element_type=jnp.float32) + b4
        o_ref[:, pl.ds(lo, LANE_TILE)] = y.astype(o_ref.dtype)
        return carry

    # Rolled fori_loop actually bounds the live vreg set to one sub-block
    # (a static Python loop would let the scheduler interleave all sub-blocks
    # and risk f32 spills onto the already-busy load/store slots).
    lax.fori_loop(0, num_sub, body, None)


@functools.partial(jax.jit, static_argnames=("tile_n", "channels_first"))
def heat2d_pinn_forward(x, params, *, tile_n=4096, channels_first=False):
    """Heat2DPINN forward pass via a fused Pallas TPU kernel.

    x:      (N, 3) float32 batch of (x, y, t) points, or (3, N) if
            channels_first=True (copy-free path — preferred inside a training
            loop, since it avoids the wrapper-side transpose copy that would
            otherwise dominate HBM traffic for this tiny network).
    params: PyTorch-style parameters: w{i} of shape (out, in), b{i} of shape (out,).
    returns (N, 1) float32.
    """
    assert tile_n % LANE_TILE == 0, "tile_n must be a multiple of 256"

    if channels_first:
        assert x.shape[0] == INPUT_DIM
        n = x.shape[1]
        xt = x                                     # (3, N), no copy
    else:
        n, d = x.shape
        assert d == INPUT_DIM
        xt = x.T                                   # fused with the pad below by XLA

    tile = _choose_tile(n, tile_n)
    n_pad = _round_up(n, tile)
    grid = (n_pad // tile,)

    if n_pad != n:
        xt = jnp.pad(xt, ((0, 0), (0, n_pad - n)))

    # Kernel orientation: features on sublanes, batch on lanes.  Hidden weights
    # stay in native (out, in) layout; biases become (out, 1) columns; the head
    # weight stays a (1, 50) row so the 50->1 layer is an MXU matmul.
    w1, b1 = params["w1"], params["b1"].reshape(HIDDEN_DIM, 1)
    w2, b2 = params["w2"], params["b2"].reshape(HIDDEN_DIM, 1)
    w3, b3 = params["w3"], params["b3"].reshape(HIDDEN_DIM, 1)
    w4 = params["w4"].reshape(OUTPUT_DIM, HIDDEN_DIM)             # (1, 50)
    b4 = params["b4"].reshape(OUTPUT_DIM, 1)                      # (1, 1)

    def param_spec(p):
        # Whole (tiny) parameter array resident in VMEM, same block every step.
        return pl.BlockSpec(p.shape, lambda i: (0, 0))

    n_params = (INPUT_DIM * HIDDEN_DIM + 2 * HIDDEN_DIM * HIDDEN_DIM
                + HIDDEN_DIM * OUTPUT_DIM + 3 * HIDDEN_DIM + OUTPUT_DIM)
    flops_per_pt = 2 * (INPUT_DIM * HIDDEN_DIM + 2 * HIDDEN_DIM * HIDDEN_DIM
                        + HIDDEN_DIM * OUTPUT_DIM)
    cost = pl.CostEstimate(
        flops=flops_per_pt * n_pad,
        transcendentals=0,
        bytes_accessed=4 * (INPUT_DIM + OUTPUT_DIM) * n_pad + 4 * n_params)

    out = pl.pallas_call(
        _pinn_kernel,
        out_shape=jax.ShapeDtypeStruct((1, n_pad), jnp.float32),
        grid=grid,
        in_specs=[pl.BlockSpec((INPUT_DIM, tile), lambda i: (0, i))]
                 + [param_spec(p) for p in (w1, b1, w2, b2, w3, b3, w4, b4)],
        out_specs=pl.BlockSpec((1, tile), lambda i: (0, i)),
        compiler_params=pltpu.CompilerParams(
            dimension_semantics=("parallel",)),
        cost_estimate=cost,
    )(xt, w1, b1, w2, b2, w3, b3, w4, b4)

    # Lane-dense (1, n_pad) slab back to the PyTorch (N, 1) layout.
    return out.reshape(n_pad, 1)[:n]


def init_params(key):
    """PyTorch nn.Linear default init (U(-1/sqrt(fan_in), ...)), (out, in) weights."""
    dims = [INPUT_DIM] + [HIDDEN_DIM] * HIDDEN_LAYERS + [OUTPUT_DIM]
    params = {}
    for idx, (fan_in, fan_out) in enumerate(zip(dims[:-1], dims[1:]), start=1):
        key, kw, kb = jax.random.split(key, 3)
        bound = 1.0 / (fan_in ** 0.5)
        params[f"w{idx}"] = jax.random.uniform(
            kw, (fan_out, fan_in), jnp.float32, minval=-bound, maxval=bound)
        params[f"b{idx}"] = jax.random.uniform(
            kb, (fan_out,), jnp.float32, minval=-bound, maxval=bound)
    return params


def reference_forward(x, params):
    """Pure-JAX reference with PyTorch semantics: h = relu(h @ W.T + b)."""
    h = x
    for idx in range(1, HIDDEN_LAYERS + 1):
        h = jnp.maximum(h @ params[f"w{idx}"].T + params[f"b{idx}"], 0.0)
    return h @ params[f"w{HIDDEN_LAYERS + 1}"].T + params[f"b{HIDDEN_LAYERS + 1}"]


if __name__ == "__main__":
    key = jax.random.PRNGKey(0)
    key, kx1, kx2 = jax.random.split(key, 3)
    params = init_params(key)

    # Small batch of (x, y, t) points (PyTorch-style (N, 3) input): single grid
    # step with a 256-aligned tile.
    x_small = jax.random.uniform(kx1, (64, INPUT_DIM), jnp.float32)
    out_small = jax.block_until_ready(heat2d_pinn_forward(x_small, params))
    ref_small = reference_forward(x_small, params)
    assert out_small.shape == (64, OUTPUT_DIM)
    assert jnp.allclose(out_small, ref_small, atol=1e-4, rtol=1e-4), \
        "Pallas output mismatch vs reference (small batch)"

    # Larger ragged batch via the copy-free channels-first path: exercises
    # zero-padding and a multi-step (>=2) grid.
    x_big = jax.random.uniform(kx2, (600, INPUT_DIM), jnp.float32)
    out_big = jax.block_until_ready(
        heat2d_pinn_forward(x_big.T, params, channels_first=True))
    ref_big = reference_forward(x_big, params)
    assert out_big.shape == (600, OUTPUT_DIM)
    assert jnp.allclose(out_big, ref_big, atol=1e-4, rtol=1e-4), \
        "Pallas output mismatch vs reference (large batch)"

    print("KERNEL_OK")
</pallas_src>

<mosaic_0001>
module attributes {stable_mosaic.version = 11 : i64} {
  func.func @_pinn_kernel(%arg0: i32, %arg1: memref<3x256xf32, #tpu.memory_space<vmem>>, %arg2: memref<50x3xf32, #tpu.memory_space<vmem>>, %arg3: memref<50x1xf32, #tpu.memory_space<vmem>>, %arg4: memref<50x50xf32, #tpu.memory_space<vmem>>, %arg5: memref<50x1xf32, #tpu.memory_space<vmem>>, %arg6: memref<50x50xf32, #tpu.memory_space<vmem>>, %arg7: memref<50x1xf32, #tpu.memory_space<vmem>>, %arg8: memref<1x50xf32, #tpu.memory_space<vmem>>, %arg9: memref<1x1xf32, #tpu.memory_space<vmem>>, %arg10: memref<1x256xf32, #tpu.memory_space<vmem>>) attributes {dimension_semantics = [#tpu.dimension_semantics<parallel>], iteration_bounds = array<i64: 1>, scalar_prefetch = 0 : i64, scratch_operands = 0 : i64, tpu.core_type = #tpu.core_type<tc>, window_params = [{transform_indices = @transform_0, window_bounds = array<i64: 3, 256>}, {pipeline_mode = #tpu.pipeline_mode<synchronous>, transform_indices = @transform_1, window_bounds = array<i64: 50, 3>}, {pipeline_mode = #tpu.pipeline_mode<synchronous>, transform_indices = @transform_2, window_bounds = array<i64: 50, 1>}, {pipeline_mode = #tpu.pipeline_mode<synchronous>, transform_indices = @transform_3, window_bounds = array<i64: 50, 50>}, {pipeline_mode = #tpu.pipeline_mode<synchronous>, transform_indices = @transform_4, window_bounds = array<i64: 50, 1>}, {pipeline_mode = #tpu.pipeline_mode<synchronous>, transform_indices = @transform_5, window_bounds = array<i64: 50, 50>}, {pipeline_mode = #tpu.pipeline_mode<synchronous>, transform_indices = @transform_6, window_bounds = array<i64: 50, 1>}, {pipeline_mode = #tpu.pipeline_mode<synchronous>, transform_indices = @transform_7, window_bounds = array<i64: 1, 50>}, {pipeline_mode = #tpu.pipeline_mode<synchronous>, transform_indices = @transform_8, window_bounds = array<i64: 1, 1>}, {transform_indices = @transform_9, window_bounds = array<i64: 1, 256>}]} {
    %c0 = arith.constant 0 : index
    %c0_0 = arith.constant 0 : index
    %0 = vector.load %arg2[%c0, %c0_0] : memref<50x3xf32, #tpu.memory_space<vmem>>, vector<50x3xf32>
    %c0_1 = arith.constant 0 : index
    %c0_2 = arith.constant 0 : index
    %1 = vector.load %arg4[%c0_1, %c0_2] : memref<50x50xf32, #tpu.memory_space<vmem>>, vector<50x50xf32>
    %c0_3 = arith.constant 0 : index
    %c0_4 = arith.constant 0 : index
    %2 = vector.load %arg6[%c0_3, %c0_4] : memref<50x50xf32, #tpu.memory_space<vmem>>, vector<50x50xf32>
    %c0_5 = arith.constant 0 : index
    %c0_6 = arith.constant 0 : index
    %3 = vector.load %arg8[%c0_5, %c0_6] : memref<1x50xf32, #tpu.memory_space<vmem>>, vector<1x50xf32>
    %c0_7 = arith.constant 0 : index
    %c0_8 = arith.constant 0 : index
    %4 = vector.load %arg3[%c0_7, %c0_8] : memref<50x1xf32, #tpu.memory_space<vmem>>, vector<50x1xf32>
    %5 = vector.shape_cast %4 : vector<50x1xf32> to vector<50x1xf32>
    %6 = vector.broadcast %5 : vector<50x1xf32> to vector<50x256xf32>
    %c0_9 = arith.constant 0 : index
    %c0_10 = arith.constant 0 : index
    %7 = vector.load %arg5[%c0_9, %c0_10] : memref<50x1xf32, #tpu.memory_space<vmem>>, vector<50x1xf32>
    %8 = vector.shape_cast %7 : vector<50x1xf32> to vector<50x1xf32>
    %9 = vector.broadcast %8 : vector<50x1xf32> to vector<50x256xf32>
    %c0_11 = arith.constant 0 : index
    %c0_12 = arith.constant 0 : index
    %10 = vector.load %arg7[%c0_11, %c0_12] : memref<50x1xf32, #tpu.memory_space<vmem>>, vector<50x1xf32>
    %11 = vector.shape_cast %10 : vector<50x1xf32> to vector<50x1xf32>
    %12 = vector.broadcast %11 : vector<50x1xf32> to vector<50x256xf32>
    %c0_13 = arith.constant 0 : index
    %c0_14 = arith.constant 0 : index
    %13 = vector.load %arg9[%c0_13, %c0_14] : memref<1x1xf32, #tpu.memory_space<vmem>>, vector<1x1xf32>
    %14 = vector.shape_cast %13 : vector<1x1xf32> to vector<1x1xf32>
    %15 = vector.broadcast %14 : vector<1x1xf32> to vector<1x256xf32>
    %c0_i32 = arith.constant 0 : i32
    %c256_i32 = arith.constant 256 : i32
    %16 = arith.muli %c0_i32, %c256_i32 : i32
    %17 = tpu.assume_multiple %16, 256 : i32
    %c0_15 = arith.constant 0 : index
    %18 = arith.index_cast %17 : i32 to index
    %19 = vector.load %arg1[%c0_15, %18] : memref<3x256xf32, #tpu.memory_space<vmem>>, vector<3x256xf32>
    %cst = arith.constant dense<0.000000e+00> : vector<50x256xf32>
    %20 = tpu.matmul %0, %19, %cst {dimension_numbers = #tpu.dot_dimension_numbers<[1], [0], [0], [1], [0, 0, 1, 1], [], []>} : vector<50x3xf32>, vector<3x256xf32>, vector<50x256xf32> -> vector<50x256xf32>
    %21 = arith.addf %20, %6 : vector<50x256xf32>
    %cst_16 = arith.constant 0.000000e+00 : f32
    %22 = vector.broadcast %cst_16 : f32 to vector<50x256xf32>
    %23 = arith.maximumf %21, %22 : vector<50x256xf32>
    %cst_17 = arith.constant dense<0.000000e+00> : vector<50x256xf32>
    %24 = tpu.matmul %1, %23, %cst_17 {dimension_numbers = #tpu.dot_dimension_numbers<[1], [0], [0], [1], [0, 0, 1, 1], [], []>} : vector<50x50xf32>, vector<50x256xf32>, vector<50x256xf32> -> vector<50x256xf32>
    %25 = arith.addf %24, %9 : vector<50x256xf32>
    %cst_18 = arith.constant 0.000000e+00 : f32
    %26 = vector.broadcast %cst_18 : f32 to vector<50x256xf32>
    %27 = arith.maximumf %25, %26 : vector<50x256xf32>
    %cst_19 = arith.constant dense<0.000000e+00> : vector<50x256xf32>
    %28 = tpu.matmul %2, %27, %cst_19 {dimension_numbers = #tpu.dot_dimension_numbers<[1], [0], [0], [1], [0, 0, 1, 1], [], []>} : vector<50x50xf32>, vector<50x256xf32>, vector<50x256xf32> -> vector<50x256xf32>
    %29 = arith.addf %28, %12 : vector<50x256xf32>
    %cst_20 = arith.constant 0.000000e+00 : f32
    %30 = vector.broadcast %cst_20 : f32 to vector<50x256xf32>
    %31 = arith.maximumf %29, %30 : vector<50x256xf32>
    %cst_21 = arith.constant dense<0.000000e+00> : vector<1x256xf32>
    %32 = tpu.matmul %3, %31, %cst_21 {dimension_numbers = #tpu.dot_dimension_numbers<[1], [0], [0], [1], [0, 0, 1, 1], [], []>} : vector<1x50xf32>, vector<50x256xf32>, vector<1x256xf32> -> vector<1x256xf32>
    %33 = arith.addf %32, %15 : vector<1x256xf32>
    %c0_22 = arith.constant 0 : index
    %34 = arith.index_cast %17 : i32 to index
    %35 = vector.load %arg10[%c0_22, %34] : memref<1x256xf32, #tpu.memory_space<vmem>>, vector<1x256xf32>
    tpu.vector_store %arg10[%c0_22, %34], %33 {strides = array<i32>} : memref<1x256xf32, #tpu.memory_space<vmem>>, vector<1x256xf32>,
    %c1_i32 = arith.constant 1 : i32
    return
  }
  func.func @transform_0(%arg0: i32) -> (i32, i32) {
    %c0_i32 = arith.constant 0 : i32
    %c0_i32_0 = arith.constant 0 : i32
    return %c0_i32, %arg0 : i32, i32
  }
  func.func @transform_1(%arg0: i32) -> (i32, i32) {
    %c0_i32 = arith.constant 0 : i32
    %c0_i32_0 = arith.constant 0 : i32
    %c0_i32_1 = arith.constant 0 : i32
    return %c0_i32, %c0_i32_0 : i32, i32
  }
  func.func @transform_2(%arg0: i32) -> (i32, i32) {
    %c0_i32 = arith.constant 0 : i32
    %c0_i32_0 = arith.constant 0 : i32
    %c0_i32_1 = arith.constant 0 : i32
    return %c0_i32, %c0_i32_0 : i32, i32
  }
  func.func @transform_3(%arg0: i32) -> (i32, i32) {
    %c0_i32 = arith.constant 0 : i32
    %c0_i32_0 = arith.constant 0 : i32
    %c0_i32_1 = arith.constant 0 : i32
    return %c0_i32, %c0_i32_0 : i32, i32
  }
  func.func @transform_4(%arg0: i32) -> (i32, i32) {
    %c0_i32 = arith.constant 0 : i32
    %c0_i32_0 = arith.constant 0 : i32
    %c0_i32_1 = arith.constant 0 : i32
    return %c0_i32, %c0_i32_0 : i32, i32
  }
  func.func @transform_5(%arg0: i32) -> (i32, i32) {
    %c0_i32 = arith.constant 0 : i32
    %c0_i32_0 = arith.constant 0 : i32
    %c0_i32_1 = arith.constant 0 : i32
    return %c0_i32, %c0_i32_0 : i32, i32
  }
  func.func @transform_6(%arg0: i32) -> (i32, i32) {
    %c0_i32 = arith.constant 0 : i32
    %c0_i32_0 = arith.constant 0 : i32
    %c0_i32_1 = arith.constant 0 : i32
    return %c0_i32, %c0_i32_0 : i32, i32
  }
  func.func @transform_7(%arg0: i32) -> (i32, i32) {
    %c0_i32 = arith.constant 0 : i32
    %c0_i32_0 = arith.constant 0 : i32
    %c0_i32_1 = arith.constant 0 : i32
    return %c0_i32, %c0_i32_0 : i32, i32
  }
  func.func @transform_8(%arg0: i32) -> (i32, i32) {
    %c0_i32 = arith.constant 0 : i32
    %c0_i32_0 = arith.constant 0 : i32
    %c0_i32_1 = arith.constant 0 : i32
    return %c0_i32, %c0_i32_0 : i32, i32
  }
  func.func @transform_9(%arg0: i32) -> (i32, i32) {
    %c0_i32 = arith.constant 0 : i32
    %c0_i32_0 = arith.constant 0 : i32
    return %c0_i32, %arg0 : i32, i32
  }
}

</mosaic_0001>

<llo_original>
// kernel: heat2d_pinn_forward.1
$region0: #{heat2d_pinn_forward.1}
  #allocation0 [shape = 'u32[]', space=smem, size = 0x4, offset = 0x4, fixed_abs, tag = 'smem constant byte address 0x4 - core index']
  #allocation1 [shape = 'u32[144,128]{1,0:T(1,128)}', space=vmem, size = 0x12000, scoped, tag = 'internal scratch']
  #allocation2 [shape = 'f32[1,1]{1,0:T(1,128)S(1)}', space=vmem, size = 0x200, scoped, tag = 'scoped memory for heat2d_pinn_forward.1']
  %s0 = inlined_call_operand.vmem [shape: f32[3,256], index: 0, kind: input, shape index: {}]
  %s1 = inlined_call_operand.vmem [shape: f32[50,3], index: 1, kind: input, shape index: {}]
  %s2 = inlined_call_operand.vmem [shape: f32[50,1], index: 2, kind: input, shape index: {}]
  %s3 = inlined_call_operand.vmem [shape: f32[50,50], index: 3, kind: input, shape index: {}]
  %s4 = inlined_call_operand.vmem [shape: f32[50,1], index: 4, kind: input, shape index: {}]
  %s5 = inlined_call_operand.vmem [shape: f32[50,50], index: 5, kind: input, shape index: {}]
  %s6 = inlined_call_operand.vmem [shape: f32[50,1], index: 6, kind: input, shape index: {}]
  %s7 = inlined_call_operand.vmem [shape: f32[1,50], index: 7, kind: input, shape index: {}]
  %s8 = inlined_call_operand.<no memory space> [shape: f32[1,1], index: 8, kind: input, shape index: {}]
  %s9 = inlined_call_operand.vmem [shape: f32[1,256], index: 9, kind: output, shape index: {}]
  %s10 = sld [smem:[#allocation0]]
  $region46: #{heat2d_pinn_forward.1} parent=0
    _
  %s12 = ssub.s32 1, %s10
  %s13 = scalar_select 0, %s12, %s10
  %v14 = vstv %s8
  %15 = vst [vmem:[#allocation2] sm:$0x1] %v14
  // Predicated region
  $region2: #{heat2d_pinn_forward.1} parent=0 // pred_check
    _
  $region3: #{heat2d_pinn_forward.1} parent=0 // pred_check_branch
    %17 = sbr.rel (0) target = $region5
  $region4: #{heat2d_pinn_forward.1} parent=0 // pred_region
    _
  $region5: #{heat2d_pinn_forward.1} parent=0 // pred_fallthru
    _
  // Predicated region
  $region6: #{heat2d_pinn_forward.1} parent=0 // pred_check
    _
  $region7: #{heat2d_pinn_forward.1} parent=0 // pred_check_branch
    %19 = sbr.rel (0) target = $region9
  $region8: #{heat2d_pinn_forward.1} parent=0 // pred_region
    _
  $region9: #{heat2d_pinn_forward.1} parent=0 // pred_fallthru
    _
  // Predicated region
  $region10: #{heat2d_pinn_forward.1} parent=0 // pred_check
    _
  $region11: #{heat2d_pinn_forward.1} parent=0 // pred_check_branch
    %21 = sbr.rel (0) target = $region13
  $region12: #{heat2d_pinn_forward.1} parent=0 // pred_region
    _
  $region13: #{heat2d_pinn_forward.1} parent=0 // pred_fallthru
    _
  // Predicated region
  $region14: #{heat2d_pinn_forward.1} parent=0 // pred_check
    _
  $region15: #{heat2d_pinn_forward.1} parent=0 // pred_check_branch
    %23 = sbr.rel (0) target = $region17
  $region16: #{heat2d_pinn_forward.1} parent=0 // pred_region
    _
  $region17: #{heat2d_pinn_forward.1} parent=0 // pred_fallthru
    _
  // Predicated region
  $region18: #{heat2d_pinn_forward.1} parent=0 // pred_check
    _
  $region19: #{heat2d_pinn_forward.1} parent=0 // pred_check_branch
    %25 = sbr.rel (0) target = $region21
  $region20: #{heat2d_pinn_forward.1} parent=0 // pred_region
    _
  $region21: #{heat2d_pinn_forward.1} parent=0 // pred_fallthru
    _
  // Predicated region
  $region22: #{heat2d_pinn_forward.1} parent=0 // pred_check
    _
  $region23: #{heat2d_pinn_forward.1} parent=0 // pred_check_branch
    %27 = sbr.rel (0) target = $region25
  $region24: #{heat2d_pinn_forward.1} parent=0 // pred_region
    _
  $region25: #{heat2d_pinn_forward.1} parent=0 // pred_fallthru
    _
  // Predicated region
  $region26: #{heat2d_pinn_forward.1} parent=0 // pred_check
    _
  $region27: #{heat2d_pinn_forward.1} parent=0 // pred_check_branch
    %29 = sbr.rel (0) target = $region29
  $region28: #{heat2d_pinn_forward.1} parent=0 // pred_region
    _
  $region29: #{heat2d_pinn_forward.1} parent=0 // pred_fallthru
    _
  // Predicated region
  $region30: #{heat2d_pinn_forward.1} parent=0 // pred_check
    _
  $region31: #{heat2d_pinn_forward.1} parent=0 // pred_check_branch
    %31 = sbr.rel (0) target = $region33
  $region32: #{heat2d_pinn_forward.1} parent=0 // pred_region
    _
  $region33: #{heat2d_pinn_forward.1} parent=0 // pred_fallthru
    _
  // Predicated region
  $region34: #{heat2d_pinn_forward.1} parent=0 // pred_check
    _
  $region35: #{heat2d_pinn_forward.1} parent=0 // pred_check_branch
    %33 = sbr.rel (0) target = $region37
  $region36: #{heat2d_pinn_forward.1} parent=0 // pred_region
    _
  $region37: #{heat2d_pinn_forward.1} parent=0 // pred_fallthru
    _
  %v34 = vld [vmem:[%s1] sm:$0xff]
  %v35 = vld [vmem:[%s1 + $0x8] sm:$0xff]
  %v36 = vld [vmem:[%s1 + $0x10] sm:$0xff]
  %v37 = vld [vmem:[%s1 + $0x18] sm:$0xff]
  %v38 = vld [vmem:[%s1 + $0x20] sm:$0xff]
  %v39 = vld [vmem:[%s1 + $0x28] sm:$0xff]
  %v40 = vld [vmem:[%s1 + $0x30] sm:$0x3]
  %v41 = vld [vmem:[%s3] sm:$0xff]
  %v42 = vld [vmem:[%s3 + $0x8] sm:$0xff]
  %v43 = vld [vmem:[%s3 + $0x10] sm:$0xff]
  %v44 = vld [vmem:[%s3 + $0x18] sm:$0xff]
  %v45 = vld [vmem:[%s3 + $0x20] sm:$0xff]
  %v46 = vld [vmem:[%s3 + $0x28] sm:$0xff]
  %v47 = vld [vmem:[%s3 + $0x30] sm:$0x3]
  %v48 = vld [vmem:[%s5] sm:$0xff]
  %v49 = vld [vmem:[%s5 + $0x8] sm:$0xff]
  %v50 = vld [vmem:[%s5 + $0x10] sm:$0xff]
  %v51 = vld [vmem:[%s5 + $0x18] sm:$0xff]
  %v52 = vld [vmem:[%s5 + $0x20] sm:$0xff]
  %v53 = vld [vmem:[%s5 + $0x28] sm:$0xff]
  %v54 = vld [vmem:[%s5 + $0x30] sm:$0x3]
  %v55 = vld [vmem:[%s7] sm:$0x1]
  %v56 = vld [vmem:[%s2] sm:$0xff]
  %v57 = vld [vmem:[%s2 + $0x8] sm:$0xff]
  %v58 = vld [vmem:[%s2 + $0x10] sm:$0xff]
  %v59 = vld [vmem:[%s2 + $0x18] sm:$0xff]
  %v60 = vld [vmem:[%s2 + $0x20] sm:$0xff]
  %v61 = vld [vmem:[%s2 + $0x28] sm:$0xff]
  %v62 = vld [vmem:[%s2 + $0x30] sm:$0x3]
  %64 = vset.pattern.permute.xlu0 0
  %65 = vperm.xlu0 %64, %v56
  %v66 = vpop.permute.xlu0 %65
  %69 = vset.pattern.permute.xlu0 0
  %70 = vperm.xlu0 %69, %v57
  %v71 = vpop.permute.xlu0 %70
  %74 = vset.pattern.permute.xlu0 0
  %75 = vperm.xlu0 %74, %v58
  %v76 = vpop.permute.xlu0 %75
  %79 = vset.pattern.permute.xlu0 0
  %80 = vperm.xlu0 %79, %v59
  %v81 = vpop.permute.xlu0 %80
  %84 = vset.pattern.permute.xlu0 0
  %85 = vperm.xlu0 %84, %v60
  %v86 = vpop.permute.xlu0 %85
  %89 = vset.pattern.permute.xlu0 0
  %90 = vperm.xlu0 %89, %v61
  %v91 = vpop.permute.xlu0 %90
  %94 = vset.pattern.permute.xlu0 0
  %95 = vperm.xlu0 %94, %v62
  %v96 = vpop.permute.xlu0 %95
  %v98 = vld [vmem:[%s4] sm:$0xff]
  %v99 = vld [vmem:[%s4 + $0x8] sm:$0xff]
  %v100 = vld [vmem:[%s4 + $0x10] sm:$0xff]
  %v101 = vld [vmem:[%s4 + $0x18] sm:$0xff]
  %v102 = vld [vmem:[%s4 + $0x20] sm:$0xff]
  %v103 = vld [vmem:[%s4 + $0x28] sm:$0xff]
  %v104 = vld [vmem:[%s4 + $0x30] sm:$0x3]
  %106 = vset.pattern.permute.xlu0 0
  %107 = vperm.xlu0 %106, %v98
  %v108 = vpop.permute.xlu0 %107
  %111 = vset.pattern.permute.xlu0 0
  %112 = vperm.xlu0 %111, %v99
  %v113 = vpop.permute.xlu0 %112
  %116 = vset.pattern.permute.xlu0 0
  %117 = vperm.xlu0 %116, %v100
  %v118 = vpop.permute.xlu0 %117
  %121 = vset.pattern.permute.xlu0 0
  %122 = vperm.xlu0 %121, %v101
  %v123 = vpop.permute.xlu0 %122
  %126 = vset.pattern.permute.xlu0 0
  %127 = vperm.xlu0 %126, %v102
  %v128 = vpop.permute.xlu0 %127
  %131 = vset.pattern.permute.xlu0 0
  %132 = vperm.xlu0 %131, %v103
  %v133 = vpop.permute.xlu0 %132
  %136 = vset.pattern.permute.xlu0 0
  %137 = vperm.xlu0 %136, %v104
  %v138 = vpop.permute.xlu0 %137
  %v140 = vld [vmem:[%s6] sm:$0xff]
  %v141 = vld [vmem:[%s6 + $0x8] sm:$0xff]
  %v142 = vld [vmem:[%s6 + $0x10] sm:$0xff]
  %v143 = vld [vmem:[%s6 + $0x18] sm:$0xff]
  %v144 = vld [vmem:[%s6 + $0x20] sm:$0xff]
  %v145 = vld [vmem:[%s6 + $0x28] sm:$0xff]
  %v146 = vld [vmem:[%s6 + $0x30] sm:$0x3]
  %148 = vset.pattern.permute.xlu0 0
  %149 = vperm.xlu0 %148, %v140
  %v150 = vpop.permute.xlu0 %149
  %153 = vset.pattern.permute.xlu0 0
  %154 = vperm.xlu0 %153, %v141
  %v155 = vpop.permute.xlu0 %154
  %158 = vset.pattern.permute.xlu0 0
  %159 = vperm.xlu0 %158, %v142
  %v160 = vpop.permute.xlu0 %159
  %163 = vset.pattern.permute.xlu0 0
  %164 = vperm.xlu0 %163, %v143
  %v165 = vpop.permute.xlu0 %164
  %168 = vset.pattern.permute.xlu0 0
  %169 = vperm.xlu0 %168, %v144
  %v170 = vpop.permute.xlu0 %169
  %173 = vset.pattern.permute.xlu0 0
  %174 = vperm.xlu0 %173, %v145
  %v175 = vpop.permute.xlu0 %174
  %178 = vset.pattern.permute.xlu0 0
  %179 = vperm.xlu0 %178, %v146
  %v180 = vpop.permute.xlu0 %179
  %v182 = vld [vmem:[#allocation2] sm:$0x1]
  %184 = vset.pattern.permute.xlu0 0
  %185 = vperm.xlu0 %184, %v182
  %v186 = vpop.permute.xlu0 %185
  %v188 = vlaneseq
  %v189 = vshrl.u32 %v188, 7
  %v190 = vsub.s32 0, %v189
  %v191 = vrot.slane %v186, %v190
  %v192 = vld [vmem:[%s0] sm:$0x77]
  %v194 = vcombine.high %v192, %v192
  %vm195 = vcmask 23552
  %v197 = vsel %vm195, %v34, 0
  %v200 = vsel %vm195, %v35, 0
  %v203 = vsel %vm195, %v36, 0
  %v206 = vsel %vm195, %v37, 0
  %v209 = vsel %vm195, %v38, 0
  %v212 = vsel %vm195, %v39, 0
  %v215 = vsel %vm195, %v40, 0
  %vm217 = vcmask 1042432
  %v218 = vsel %vm217, %v192, 0
  %v220 = vsel %vm217, %v194, 0
  %222 = vmatprep.subr.mxu0 %v220
  %223 = vmatpush1.msra.mxu0 %v218
  %224 = vmatprep.subr.mxu0 0.0
  %225 = vmatpush1.msra.mxu0 0.0
  %226 = vmatprep.subr.mxu0 0.0
  %227 = vmatpush1.msra.mxu0 0.0
  %228 = vmatprep.subr.mxu0 0.0
  %229 = vmatpush1.msra.mxu0 0.0
  %230 = vmatprep.subr.mxu0 0.0
  %231 = vmatpush1.msra.mxu0 0.0
  %232 = vmatprep.subr.mxu0 0.0
  %233 = vmatpush1.msra.mxu0 0.0
  %234 = vmatprep.subr.mxu0 0.0
  %235 = vmatpush1.msra.mxu0 0.0
  %236 = vmatprep.subr.mxu0 0.0
  %237 = vmatpush1.msra.mxu0 0.0
  %238 = vmatprep.subr.mxu0 0.0
  %239 = vmatpush1.msra.mxu0 0.0
  %240 = vmatprep.subr.mxu0 0.0
  %241 = vmatpush1.msra.mxu0 0.0
  %242 = vmatprep.subr.mxu0 0.0
  %243 = vmatpush1.msra.mxu0 0.0
  %244 = vmatprep.subr.mxu0 0.0
  %245 = vmatpush1.msra.mxu0 0.0
  %246 = vmatprep.subr.mxu0 0.0
  %247 = vmatpush1.msra.mxu0 0.0
  %248 = vmatprep.subr.mxu0 0.0
  %249 = vmatpush1.msra.mxu0 0.0
  %250 = vmatprep.subr.mxu0 0.0
  %251 = vmatpush1.msra.mxu0 0.0
  %252 = vmatprep.subr.mxu0 0.0
  %253 = vmatpush1.msra.mxu0 0.0
  %254 = vmatprep.subr.mxu0 0.0
  %255 = vmatpush1.msra.mxu0 0.0
  %256 = vmatprep.subr.mxu0 0.0
  %257 = vmatpush1.msra.mxu0 0.0
  %258 = vmatprep.subr.mxu0 0.0
  %259 = vmatpush1.msra.mxu0 0.0
  %260 = vmatprep.subr.mxu0 0.0
  %261 = vmatpush1.msra.mxu0 0.0
  %262 = vmatprep.subr.mxu0 0.0
  %263 = vmatpush1.msra.mxu0 0.0
  %264 = vmatprep.subr.mxu0 0.0
  %265 = vmatpush1.msra.mxu0 0.0
  %266 = vmatprep.subr.mxu0 0.0
  %267 = vmatpush1.msra.mxu0 0.0
  %268 = vmatprep.subr.mxu0 0.0
  %269 = vmatpush1.msra.mxu0 0.0
  %270 = vmatprep.subr.mxu0 0.0
  %271 = vmatpush1.msra.mxu0 0.0
  %272 = vmatprep.subr.mxu0 0.0
  %273 = vmatpush1.msra.mxu0 0.0
  %274 = vmatprep.subr.mxu0 0.0
  %275 = vmatpush1.msra.mxu0 0.0
  %276 = vmatprep.subr.mxu0 0.0
  %277 = vmatpush1.msra.mxu0 0.0
  %278 = vmatprep.subr.mxu0 0.0
  %279 = vmatpush1.msra.mxu0 0.0
  %280 = vmatprep.subr.mxu0 0.0
  %281 = vmatpush1.msra.mxu0 0.0
  %282 = vmatprep.subr.mxu0 0.0
  %283 = vmatpush1.msra.mxu0 0.0
  %284 = vmatprep.subr.mxu0 0.0
  %285 = vmatpush1.msra.mxu0 0.0
  %286 = vmatprep.mubr.f32.mxu0 0.0
  %287 = vmatmul.mubr.f32.gmra.mrb[0].mxu0 %v197
  %v288 = vpop.f32.mrb[0].mxu0
  %v289 = vadd.f32 %v66, %v288
  %v290 = vpop.f32.mrb[0].mxu0
  %v291 = vadd.f32 %v66, %v290
  %292 = vmatprep.mubr.f32.mxu0 0.0
  %293 = vmatmul.mubr.f32.gmra.mrb[0].mxu0 %v200
  %v294 = vpop.f32.mrb[0].mxu0
  %v295 = vadd.f32 %v71, %v294
  %v296 = vpop.f32.mrb[0].mxu0
  %v297 = vadd.f32 %v71, %v296
  %298 = vmatprep.mubr.f32.mxu0 0.0
  %299 = vmatmul.mubr.f32.gmra.mrb[0].mxu0 %v203
  %v300 = vpop.f32.mrb[0].mxu0
  %v301 = vadd.f32 %v76, %v300
  %v302 = vpop.f32.mrb[0].mxu0
  %v303 = vadd.f32 %v76, %v302
  %304 = vmatprep.mubr.f32.mxu0 0.0
  %305 = vmatmul.mubr.f32.gmra.mrb[0].mxu0 %v206
  %v306 = vpop.f32.mrb[0].mxu0
  %v307 = vadd.f32 %v81, %v306
  %v308 = vpop.f32.mrb[0].mxu0
  %v309 = vadd.f32 %v81, %v308
  %310 = vmatprep.mubr.f32.mxu0 0.0
  %311 = vmatmul.mubr.f32.gmra.mrb[0].mxu0 %v209
  %v312 = vpop.f32.mrb[0].mxu0
  %v313 = vadd.f32 %v86, %v312
  %v314 = vpop.f32.mrb[0].mxu0
  %v315 = vadd.f32 %v86, %v314
  %316 = vmatprep.mubr.f32.mxu0 0.0
  %317 = vmatmul.mubr.f32.gmra.mrb[0].mxu0 %v212
  %v318 = vpop.f32.mrb[0].mxu0
  %v319 = vadd.f32 %v91, %v318
  %v320 = vpop.f32.mrb[0].mxu0
  %v321 = vadd.f32 %v91, %v320
  %322 = vmatprep.mubr.f32.mxu0 0.0
  %323 = vmatmul.mubr.f32.gmra.mrb[0].mxu0 %v215
  %v324 = vpop.f32.mrb[0].mxu0
  %v325 = vadd.f32 %v96, %v324
  %v326 = vpop.f32.mrb[0].mxu0
  %v327 = vadd.f32 %v96, %v326
  %328 = vdwg.mxu0
  %v329 = vmax.f32 %v289, 0.0
  %v330 = vmax.f32 %v291, 0.0
  %v331 = vmax.f32 %v295, 0.0
  %v332 = vmax.f32 %v297, 0.0
  %v333 = vmax.f32 %v301, 0.0
  %v334 = vmax.f32 %v303, 0.0
  %v335 = vmax.f32 %v307, 0.0
  %v336 = vmax.f32 %v309, 0.0
  %v337 = vmax.f32 %v313, 0.0
  %v338 = vmax.f32 %v315, 0.0
  %v339 = vmax.f32 %v319, 0.0
  %v340 = vmax.f32 %v321, 0.0
  %v341 = vmax.f32 %v325, 0.0
  %v342 = vmax.f32 %v327, 0.0
  %vm343 = vcmask 408576
  %v345 = vsel %vm343, %v41, 0
  %v348 = vsel %vm343, %v42, 0
  %v351 = vsel %vm343, %v43, 0
  %v354 = vsel %vm343, %v44, 0
  %v357 = vsel %vm343, %v45, 0
  %v360 = vsel %vm343, %v46, 0
  %v363 = vsel %vm343, %v47, 0
  %vm365 = vcmask 1041408
  %v367 = vsel %vm365, %v341, 0
  %v370 = vsel %vm365, %v342, 0
  %372 = vmatprep.subr.mxu0 %v330
  %373 = vmatpush1.msra.mxu0 %v329
  %374 = vmatprep.subr.mxu0 %v332
  %375 = vmatpush1.msra.mxu0 %v331
  %376 = vmatprep.subr.mxu0 %v334
  %377 = vmatpush1.msra.mxu0 %v333
  %378 = vmatprep.subr.mxu0 %v336
  %379 = vmatpush1.msra.mxu0 %v335
  %380 = vmatprep.subr.mxu0 %v338
  %381 = vmatpush1.msra.mxu0 %v337
  %382 = vmatprep.subr.mxu0 %v340
  %383 = vmatpush1.msra.mxu0 %v339
  %384 = vmatprep.subr.mxu0 %v370
  %385 = vmatpush1.msra.mxu0 %v367
  %386 = vmatprep.subr.mxu0 0.0
  %387 = vmatpush1.msra.mxu0 0.0
  %388 = vmatprep.subr.mxu0 0.0
  %389 = vmatpush1.msra.mxu0 0.0
  %390 = vmatprep.subr.mxu0 0.0
  %391 = vmatpush1.msra.mxu0 0.0
  %392 = vmatprep.subr.mxu0 0.0
  %393 = vmatpush1.msra.mxu0 0.0
  %394 = vmatprep.subr.mxu0 0.0
  %395 = vmatpush1.msra.mxu0 0.0
  %396 = vmatprep.subr.mxu0 0.0
  %397 = vmatpush1.msra.mxu0 0.0
  %398 = vmatprep.subr.mxu0 0.0
  %399 = vmatpush1.msra.mxu0 0.0
  %400 = vmatprep.subr.mxu0 0.0
  %401 = vmatpush1.msra.mxu0 0.0
  %402 = vmatprep.subr.mxu0 0.0
  %403 = vmatpush1.msra.mxu0 0.0
  %404 = vmatprep.subr.mxu0 0.0
  %405 = vmatpush1.msra.mxu0 0.0
  %406 = vmatprep.subr.mxu0 0.0
  %407 = vmatpush1.msra.mxu0 0.0
  %408 = vmatprep.subr.mxu0 0.0
  %409 = vmatpush1.msra.mxu0 0.0
  %410 = vmatprep.subr.mxu0 0.0
  %411 = vmatpush1.msra.mxu0 0.0
  %412 = vmatprep.subr.mxu0 0.0
  %413 = vmatpush1.msra.mxu0 0.0
  %414 = vmatprep.subr.mxu0 0.0
  %415 = vmatpush1.msra.mxu0 0.0
  %416 = vmatprep.subr.mxu0 0.0
  %417 = vmatpush1.msra.mxu0 0.0
  %418 = vmatprep.subr.mxu0 0.0
  %419 = vmatpush1.msra.mxu0 0.0
  %420 = vmatprep.subr.mxu0 0.0
  %421 = vmatpush1.msra.mxu0 0.0
  %422 = vmatprep.subr.mxu0 0.0
  %423 = vmatpush1.msra.mxu0 0.0
  %424 = vmatprep.subr.mxu0 0.0
  %425 = vmatpush1.msra.mxu0 0.0
  %426 = vmatprep.subr.mxu0 0.0
  %427 = vmatpush1.msra.mxu0 0.0
  %428 = vmatprep.subr.mxu0 0.0
  %429 = vmatpush1.msra.mxu0 0.0
  %430 = vmatprep.subr.mxu0 0.0
  %431 = vmatpush1.msra.mxu0 0.0
  %432 = vmatprep.subr.mxu0 0.0
  %433 = vmatpush1.msra.mxu0 0.0
  %434 = vmatprep.subr.mxu0 0.0
  %435 = vmatpush1.msra.mxu0 0.0
  %436 = vmatprep.mubr.f32.mxu0 0.0
  %437 = vmatmul.mubr.f32.gmra.mrb[0].mxu0 %v345
  %v438 = vpop.f32.mrb[0].mxu0
  %v439 = vadd.f32 %v108, %v438
  %v440 = vpop.f32.mrb[0].mxu0
  %v441 = vadd.f32 %v108, %v440
  %442 = vmatprep.mubr.f32.mxu0 0.0
  %443 = vmatmul.mubr.f32.gmra.mrb[0].mxu0 %v348
  %v444 = vpop.f32.mrb[0].mxu0
  %v445 = vadd.f32 %v113, %v444
  %v446 = vpop.f32.mrb[0].mxu0
  %v447 = vadd.f32 %v113, %v446
  %448 = vmatprep.mubr.f32.mxu0 0.0
  %449 = vmatmul.mubr.f32.gmra.mrb[0].mxu0 %v351
  %v450 = vpop.f32.mrb[0].mxu0
  %v451 = vadd.f32 %v118, %v450
  %v452 = vpop.f32.mrb[0].mxu0
  %v453 = vadd.f32 %v118, %v452
  %454 = vmatprep.mubr.f32.mxu0 0.0
  %455 = vmatmul.mubr.f32.gmra.mrb[0].mxu0 %v354
  %v456 = vpop.f32.mrb[0].mxu0
  %v457 = vadd.f32 %v123, %v456
  %v458 = vpop.f32.mrb[0].mxu0
  %v459 = vadd.f32 %v123, %v458
  %460 = vmatprep.mubr.f32.mxu0 0.0
  %461 = vmatmul.mubr.f32.gmra.mrb[0].mxu0 %v357
  %v462 = vpop.f32.mrb[0].mxu0
  %v463 = vadd.f32 %v128, %v462
  %v464 = vpop.f32.mrb[0].mxu0
  %v465 = vadd.f32 %v128, %v464
  %466 = vmatprep.mubr.f32.mxu0 0.0
  %467 = vmatmul.mubr.f32.gmra.mrb[0].mxu0 %v360
  %v468 = vpop.f32.mrb[0].mxu0
  %v469 = vadd.f32 %v133, %v468
  %v470 = vpop.f32.mrb[0].mxu0
  %v471 = vadd.f32 %v133, %v470
  %472 = vmatprep.mubr.f32.mxu0 0.0
  %473 = vmatmul.mubr.f32.gmra.mrb[0].mxu0 %v363
  %v474 = vpop.f32.mrb[0].mxu0
  %v475 = vadd.f32 %v138, %v474
  %v476 = vpop.f32.mrb[0].mxu0
  %v477 = vadd.f32 %v138, %v476
  %478 = vdwg.mxu0
  %v479 = vmax.f32 %v439, 0.0
  %v480 = vmax.f32 %v441, 0.0
  %v481 = vmax.f32 %v445, 0.0
  %v482 = vmax.f32 %v447, 0.0
  %v483 = vmax.f32 %v451, 0.0
  %v484 = vmax.f32 %v453, 0.0
  %v485 = vmax.f32 %v457, 0.0
  %v486 = vmax.f32 %v459, 0.0
  %v487 = vmax.f32 %v463, 0.0
  %v488 = vmax.f32 %v465, 0.0
  %v489 = vmax.f32 %v469, 0.0
  %v490 = vmax.f32 %v471, 0.0
  %v491 = vmax.f32 %v475, 0.0
  %v492 = vmax.f32 %v477, 0.0
  %v494 = vsel %vm343, %v48, 0
  %v497 = vsel %vm343, %v49, 0
  %v500 = vsel %vm343, %v50, 0
  %v503 = vsel %vm343, %v51, 0
  %v506 = vsel %vm343, %v52, 0
  %v509 = vsel %vm343, %v53, 0
  %v512 = vsel %vm343, %v54, 0
  %v515 = vsel %vm365, %v491, 0
  %v518 = vsel %vm365, %v492, 0
  %520 = vmatprep.subr.mxu0 %v480
  %521 = vmatpush1.msra.mxu0 %v479
  %522 = vmatprep.subr.mxu0 %v482
  %523 = vmatpush1.msra.mxu0 %v481
  %524 = vmatprep.subr.mxu0 %v484
  %525 = vmatpush1.msra.mxu0 %v483
  %526 = vmatprep.subr.mxu0 %v486
  %527 = vmatpush1.msra.mxu0 %v485
  %528 = vmatprep.subr.mxu0 %v488
  %529 = vmatpush1.msra.mxu0 %v487
  %530 = vmatprep.subr.mxu0 %v490
  %531 = vmatpush1.msra.mxu0 %v489
  %532 = vmatprep.subr.mxu0 %v518
  %533 = vmatpush1.msra.mxu0 %v515
  %534 = vmatprep.subr.mxu0 0.0
  %535 = vmatpush1.msra.mxu0 0.0
  %536 = vmatprep.subr.mxu0 0.0
  %537 = vmatpush1.msra.mxu0 0.0
  %538 = vmatprep.subr.mxu0 0.0
  %539 = vmatpush1.msra.mxu0 0.0
  %540 = vmatprep.subr.mxu0 0.0
  %541 = vmatpush1.msra.mxu0 0.0
  %542 = vmatprep.subr.mxu0 0.0
  %543 = vmatpush1.msra.mxu0 0.0
  %544 = vmatprep.subr.mxu0 0.0
  %545 = vmatpush1.msra.mxu0 0.0
  %546 = vmatprep.subr.mxu0 0.0
  %547 = vmatpush1.msra.mxu0 0.0
  %548 = vmatprep.subr.mxu0 0.0
  %549 = vmatpush1.msra.mxu0 0.0
  %550 = vmatprep.subr.mxu0 0.0
  %551 = vmatpush1.msra.mxu0 0.0
  %552 = vmatprep.subr.mxu0 0.0
  %553 = vmatpush1.msra.mxu0 0.0
  %554 = vmatprep.subr.mxu0 0.0
  %555 = vmatpush1.msra.mxu0 0.0
  %556 = vmatprep.subr.mxu0 0.0
  %557 = vmatpush1.msra.mxu0 0.0
  %558 = vmatprep.subr.mxu0 0.0
  %559 = vmatpush1.msra.mxu0 0.0
  %560 = vmatprep.subr.mxu0 0.0
  %561 = vmatpush1.msra.mxu0 0.0
  %562 = vmatprep.subr.mxu0 0.0
  %563 = vmatpush1.msra.mxu0 0.0
  %564 = vmatprep.subr.mxu0 0.0
  %565 = vmatpush1.msra.mxu0 0.0
  %566 = vmatprep.subr.mxu0 0.0
  %567 = vmatpush1.msra.mxu0 0.0
  %568 = vmatprep.subr.mxu0 0.0
  %569 = vmatpush1.msra.mxu0 0.0
  %570 = vmatprep.subr.mxu0 0.0
  %571 = vmatpush1.msra.mxu0 0.0
  %572 = vmatprep.subr.mxu0 0.0
  %573 = vmatpush1.msra.mxu0 0.0
  %574 = vmatprep.subr.mxu0 0.0
  %575 = vmatpush1.msra.mxu0 0.0
  %576 = vmatprep.subr.mxu0 0.0
  %577 = vmatpush1.msra.mxu0 0.0
  %578 = vmatprep.subr.mxu0 0.0
  %579 = vmatpush1.msra.mxu0 0.0
  %580 = vmatprep.subr.mxu0 0.0
  %581 = vmatpush1.msra.mxu0 0.0
  %582 = vmatprep.subr.mxu0 0.0
  %583 = vmatpush1.msra.mxu0 0.0
  %584 = vmatprep.mubr.f32.mxu0 0.0
  %585 = vmatmul.mubr.f32.gmra.mrb[0].mxu0 %v494
  %v586 = vpop.f32.mrb[0].mxu0
  %v587 = vadd.f32 %v150, %v586
  %v588 = vpop.f32.mrb[0].mxu0
  %v589 = vadd.f32 %v150, %v588
  %590 = vmatprep.mubr.f32.mxu0 0.0
  %591 = vmatmul.mubr.f32.gmra.mrb[0].mxu0 %v497
  %v592 = vpop.f32.mrb[0].mxu0
  %v593 = vadd.f32 %v155, %v592
  %v594 = vpop.f32.mrb[0].mxu0
  %v595 = vadd.f32 %v155, %v594
  %596 = vmatprep.mubr.f32.mxu0 0.0
  %597 = vmatmul.mubr.f32.gmra.mrb[0].mxu0 %v500
  %v598 = vpop.f32.mrb[0].mxu0
  %v599 = vadd.f32 %v160, %v598
  %v600 = vpop.f32.mrb[0].mxu0
  %v601 = vadd.f32 %v160, %v600
  %602 = vmatprep.mubr.f32.mxu0 0.0
  %603 = vmatmul.mubr.f32.gmra.mrb[0].mxu0 %v503
  %v604 = vpop.f32.mrb[0].mxu0
  %v605 = vadd.f32 %v165, %v604
  %v606 = vpop.f32.mrb[0].mxu0
  %v607 = vadd.f32 %v165, %v606
  %608 = vmatprep.mubr.f32.mxu0 0.0
  %609 = vmatmul.mubr.f32.gmra.mrb[0].mxu0 %v506
  %v610 = vpop.f32.mrb[0].mxu0
  %v611 = vadd.f32 %v170, %v610
  %v612 = vpop.f32.mrb[0].mxu0
  %v613 = vadd.f32 %v170, %v612
  %614 = vmatprep.mubr.f32.mxu0 0.0
  %615 = vmatmul.mubr.f32.gmra.mrb[0].mxu0 %v509
  %v616 = vpop.f32.mrb[0].mxu0
  %v617 = vadd.f32 %v175, %v616
  %v618 = vpop.f32.mrb[0].mxu0
  %v619 = vadd.f32 %v175, %v618
  %620 = vmatprep.mubr.f32.mxu0 0.0
  %621 = vmatmul.mubr.f32.gmra.mrb[0].mxu0 %v512
  %v622 = vpop.f32.mrb[0].mxu0
  %v623 = vadd.f32 %v180, %v622
  %v624 = vpop.f32.mrb[0].mxu0
  %v625 = vadd.f32 %v180, %v624
  %626 = vdwg.mxu0
  %v627 = vmax.f32 %v587, 0.0
  %v628 = vmax.f32 %v589, 0.0
  %v629 = vmax.f32 %v593, 0.0
  %v630 = vmax.f32 %v595, 0.0
  %v631 = vmax.f32 %v599, 0.0
  %v632 = vmax.f32 %v601, 0.0
  %v633 = vmax.f32 %v605, 0.0
  %v634 = vmax.f32 %v607, 0.0
  %v635 = vmax.f32 %v611, 0.0
  %v636 = vmax.f32 %v613, 0.0
  %v637 = vmax.f32 %v617, 0.0
  %v638 = vmax.f32 %v619, 0.0
  %v639 = vmax.f32 %v623, 0.0
  %v640 = vmax.f32 %v625, 0.0
  %v642 = vsel %vm343, %v55, 0
  %v645 = vsel %vm365, %v639, 0
  %v648 = vsel %vm365, %v640, 0
  %650 = vmatprep.subr.mxu0 %v628
  %651 = vmatpush1.msra.mxu0 %v627
  %652 = vmatprep.subr.mxu0 %v630
  %653 = vmatpush1.msra.mxu0 %v629
  %654 = vmatprep.subr.mxu0 %v632
  %655 = vmatpush1.msra.mxu0 %v631
  %656 = vmatprep.subr.mxu0 %v634
  %657 = vmatpush1.msra.mxu0 %v633
  %658 = vmatprep.subr.mxu0 %v636
  %659 = vmatpush1.msra.mxu0 %v635
  %660 = vmatprep.subr.mxu0 %v638
  %661 = vmatpush1.msra.mxu0 %v637
  %662 = vmatprep.subr.mxu0 %v648
  %663 = vmatpush1.msra.mxu0 %v645
  %664 = vmatprep.subr.mxu0 0.0
  %665 = vmatpush1.msra.mxu0 0.0
  %666 = vmatprep.subr.mxu0 0.0
  %667 = vmatpush1.msra.mxu0 0.0
  %668 = vmatprep.subr.mxu0 0.0
  %669 = vmatpush1.msra.mxu0 0.0
  %670 = vmatprep.subr.mxu0 0.0
  %671 = vmatpush1.msra.mxu0 0.0
  %672 = vmatprep.subr.mxu0 0.0
  %673 = vmatpush1.msra.mxu0 0.0
  %674 = vmatprep.subr.mxu0 0.0
  %675 = vmatpush1.msra.mxu0 0.0
  %676 = vmatprep.subr.mxu0 0.0
  %677 = vmatpush1.msra.mxu0 0.0
  %678 = vmatprep.subr.mxu0 0.0
  %679 = vmatpush1.msra.mxu0 0.0
  %680 = vmatprep.subr.mxu0 0.0
  %681 = vmatpush1.msra.mxu0 0.0
  %682 = vmatprep.subr.mxu0 0.0
  %683 = vmatpush1.msra.mxu0 0.0
  %684 = vmatprep.subr.mxu0 0.0
  %685 = vmatpush1.msra.mxu0 0.0
  %686 = vmatprep.subr.mxu0 0.0
  %687 = vmatpush1.msra.mxu0 0.0
  %688 = vmatprep.subr.mxu0 0.0
  %689 = vmatpush1.msra.mxu0 0.0
  %690 = vmatprep.subr.mxu0 0.0
  %691 = vmatpush1.msra.mxu0 0.0
  %692 = vmatprep.subr.mxu0 0.0
  %693 = vmatpush1.msra.mxu0 0.0
  %694 = vmatprep.subr.mxu0 0.0
  %695 = vmatpush1.msra.mxu0 0.0
  %696 = vmatprep.subr.mxu0 0.0
  %697 = vmatpush1.msra.mxu0 0.0
  %698 = vmatprep.subr.mxu0 0.0
  %699 = vmatpush1.msra.mxu0 0.0
  %700 = vmatprep.subr.mxu0 0.0
  %701 = vmatpush1.msra.mxu0 0.0
  %702 = vmatprep.subr.mxu0 0.0
  %703 = vmatpush1.msra.mxu0 0.0
  %704 = vmatprep.subr.mxu0 0.0
  %705 = vmatpush1.msra.mxu0 0.0
  %706 = vmatprep.subr.mxu0 0.0
  %707 = vmatpush1.msra.mxu0 0.0
  %708 = vmatprep.subr.mxu0 0.0
  %709 = vmatpush1.msra.mxu0 0.0
  %710 = vmatprep.subr.mxu0 0.0
  %711 = vmatpush1.msra.mxu0 0.0
  %712 = vmatprep.subr.mxu0 0.0
  %713 = vmatpush1.msra.mxu0 0.0
  %714 = vmatprep.mubr.f32.mxu0 0.0
  %715 = vmatmul.mubr.f32.gmra.mrb[0].mxu0 %v642
  %v716 = vpop.f32.mrb[0].mxu0
  %v717 = vadd.f32 %v191, %v716
  %v718 = vpop.f32.mrb[0].mxu0
  %v719 = vadd.f32 %v191, %v718
  %720 = vdwg.mxu0
  %v723 = vcombine.low %v717, %v719
  %v725 = vunpack.c.l.s4 1966171168
  %v726 = vunpack.c.0.s8 %v725
  %v727 = vlaneseq
  %v728 = vshrl.u32 %v727, 7
  %v729 = vsub.s32 %v726, %v728
  %v730 = vrot.slane %v723, %v729
  %v732 = vunpack.c.l.s4 1966171168
  %v733 = vunpack.c.0.s8 %v732
  %v734 = vlaneseq
  %v735 = vshrl.u32 %v734, 7
  %v736 = vsub.s32 %v733, %v735
  %v737 = vrot.slane %v730, %v736
  %v739 = vlaneseq
  %vm740 = vcmp.ge.s32.totalorder %v739, 0
  %vm741 = vcmp.lt.s32.totalorder %v739, 256
  %vm742 = vmand %vm740, %vm741
  %743 = vst.msk [vmem:[%s9] sm:$0x3] %vm742, %v737
  // Predicated region
  $region38: #{heat2d_pinn_forward.1} parent=0 // pred_check
    _
  $region39: #{heat2d_pinn_forward.1} parent=0 // pred_check_branch
    %745 = sbr.rel (0) target = $region41
  $region40: #{heat2d_pinn_forward.1} parent=0 // pred_region
    _
  $region41: #{heat2d_pinn_forward.1} parent=0 // pred_fallthru
    _
  // Predicated region
  $region42: #{heat2d_pinn_forward.1} parent=0 // pred_check
    _
  $region43: #{heat2d_pinn_forward.1} parent=0 // pred_check_branch
    %747 = sbr.rel (0) target = $region45
  $region44: #{heat2d_pinn_forward.1} parent=0 // pred_region
    _
  $region45: #{heat2d_pinn_forward.1} parent=0 // pred_fallthru
    _

</llo_original>
